<compile_context>
chip_gen: v7x
topology: tpu7x:2x2x1
jax: 0.10.0
libtpu: 0.0.40
codegen_flags: <defaults>
</compile_context>

<pallas_src>
import jax
import jax.numpy as jnp
from jax import lax
from jax.experimental import pallas as pl
from jax.experimental.pallas import tpu as pltpu


def _shift_next(x, axis):
    """result[..., i, ...] = x[..., i+1, ...] (wrapping) via an XLU rotate."""
    size = x.shape[axis]
    # positive shift (size-1) == shift of -1; runs on the XLU slot, not VALU.
    return pltpu.roll(x, shift=size - 1, axis=axis)


# --------------------------- fused per-sample kernel ---------------------------
def _build_kernel(has_b: bool, has_image: bool, n_channels: int):
    """Kernel computing per-sample partial sums.

    VMEM input refs (one batch sample per grid step):
      mu (1,1,L), logvar (1,1,L), depth (1,1,H,W), target (1,1,H,W),
      [b (1,1,H,W) if has_b], [image (1,C,H,W) if has_image]
    SMEM output block (1,1,4) f32:
      [kl_partial, recon_partial, edge_x_partial, edge_y_partial]
    """

    def kernel(*refs):
        idx = 0
        mu_ref = refs[idx]; idx += 1
        lv_ref = refs[idx]; idx += 1
        d_ref = refs[idx]; idx += 1
        t_ref = refs[idx]; idx += 1
        b_ref = None
        im_ref = None
        if has_b:
            b_ref = refs[idx]; idx += 1
        if has_image:
            im_ref = refs[idx]; idx += 1
        out_ref = refs[idx]

        # ---- KL partial: sum_j (1 + lv - mu^2 - exp(lv)) for this sample ----
        mu = mu_ref[...].astype(jnp.float32)
        lv = lv_ref[...].astype(jnp.float32)
        kl_part = jnp.sum(1.0 + lv - mu * mu - jnp.exp(lv))

        # ---- depth / target (depth read ONCE, feeds recon + edge terms) ----
        d = d_ref[0, 0].astype(jnp.float32)          # (H, W)
        t = t_ref[0, 0].astype(jnp.float32)
        abs_err = jnp.abs(d - t)

        # ---- reconstruction partial ----
        if has_b:
            bb = jnp.maximum(b_ref[0, 0].astype(jnp.float32), 1e-6)
            inv_bb = pl.reciprocal(bb, approx=True)   # EUP slot, ~1e-3 rel err
            recon_part = jnp.sum(abs_err * inv_bb + jnp.log(bb))
        else:
            recon_part = jnp.sum(abs_err)

        # ---- edge-aware smoothness partials (roll + mask, no :-1 slices) ----
        if has_image:
            H, W = d.shape
            col_valid = lax.broadcasted_iota(jnp.int32, (H, W), 1) < (W - 1)
            row_valid = lax.broadcasted_iota(jnp.int32, (H, W), 0) < (H - 1)

            dDx = d - _shift_next(d, axis=1)
            dDy = d - _shift_next(d, axis=0)

            # channel-accumulated image gradients: never materialize (C,H,W)
            gx_acc = jnp.zeros((H, W), jnp.float32)
            gy_acc = jnp.zeros((H, W), jnp.float32)
            for c in range(n_channels):               # static unroll, C small
                imc = im_ref[0, c].astype(jnp.float32)
                gx_acc = gx_acc + jnp.abs(imc - _shift_next(imc, axis=1))
                gy_acc = gy_acc + jnp.abs(imc - _shift_next(imc, axis=0))
            inv_c = jnp.float32(1.0 / n_channels)
            wx = jnp.exp(-gx_acc * inv_c)
            wy = jnp.exp(-gy_acc * inv_c)

            edge_x_part = jnp.sum(jnp.where(col_valid, jnp.abs(dDx) * wx, 0.0))
            edge_y_part = jnp.sum(jnp.where(row_valid, jnp.abs(dDy) * wy, 0.0))
        else:
            edge_x_part = jnp.float32(0.0)
            edge_y_part = jnp.float32(0.0)

        out_ref[0, 0, 0] = kl_part
        out_ref[0, 0, 1] = recon_part
        out_ref[0, 0, 2] = edge_x_part
        out_ref[0, 0, 3] = edge_y_part

    return kernel


def _cost_estimate(mu, depth, b, image):
    """Advisory cost hint so XLA schedules the call sensibly."""
    n_lat = int(mu.size)
    n_pix = int(depth.size)
    flops = 6 * n_lat + 4 * n_pix
    trans = n_lat                                    # exp(logvar)
    bytes_accessed = 2 * int(mu.nbytes) + 2 * int(depth.nbytes) + 16
    if b is not None:
        flops += 4 * n_pix
        trans += 2 * n_pix                           # recip + log
        bytes_accessed += int(b.nbytes)
    if image is not None:
        flops += 10 * (int(image.size) + n_pix)
        trans += 2 * n_pix                           # exp of the weight maps
        bytes_accessed += int(image.nbytes)
    return pl.CostEstimate(flops=flops, transcendentals=trans,
                           bytes_accessed=bytes_accessed)


# --------------------------------- forward ---------------------------------
def criterion_forward(depth, mu, logvar, target, b=None, image=None):
    N, C_d, H, W = depth.shape
    L = mu.shape[-1]
    mu3 = mu.reshape(N, 1, L)
    lv3 = logvar.reshape(N, 1, L)

    inputs = [mu3, lv3, depth, target]
    in_specs = [
        pl.BlockSpec((1, 1, L), lambda i: (i, 0, 0)),
        pl.BlockSpec((1, 1, L), lambda i: (i, 0, 0)),
        pl.BlockSpec((1, C_d, H, W), lambda i: (i, 0, 0, 0)),
        pl.BlockSpec((1, C_d, H, W), lambda i: (i, 0, 0, 0)),
    ]
    if b is not None:
        inputs.append(b)
        in_specs.append(pl.BlockSpec((1, C_d, H, W), lambda i: (i, 0, 0, 0)))
    n_channels = 0
    if image is not None:
        n_channels = image.shape[1]
        inputs.append(image)
        in_specs.append(
            pl.BlockSpec((1, n_channels, H, W), lambda i: (i, 0, 0, 0)))

    kernel = _build_kernel(b is not None, image is not None, n_channels)

    partials = pl.pallas_call(
        kernel,
        grid=(N,),
        out_shape=jax.ShapeDtypeStruct((N, 1, 4), jnp.float32),
        in_specs=in_specs,
        out_specs=pl.BlockSpec((1, 1, 4), lambda i: (i, 0, 0),
                               memory_space=pltpu.MemorySpace.SMEM),
        compiler_params=pltpu.CompilerParams(
            dimension_semantics=("parallel",),
            vmem_limit_bytes=32 * 1024 * 1024,
        ),
        cost_estimate=_cost_estimate(mu, depth, b, image),
    )(*inputs)

    sums = jnp.sum(partials[:, 0, :], axis=0)        # (4,) f32

    kl = (-0.5 / N) * sums[0]
    recon = sums[1] / (N * C_d * H * W)
    if image is not None:
        edge = (sums[2] / (N * C_d * H * (W - 1))
                + sums[3] / (N * C_d * (H - 1) * W))
    else:
        edge = jnp.asarray(0.0, jnp.float32)

    # TODO(synk): uncertainty_aware_smoothness needs a Canny edge detector
    # (kornia.filters.canny); no clean Pallas equivalent, returning 0.0.
    uncertainty = jnp.asarray(0.0, jnp.float32)

    return dict(kl_div=kl, recon_loss=recon, edgeaware_loss=edge,
                uncertaintyaware_loss=uncertainty)


# ---------------------- pure-JAX reference (check) -------------------
def _reference(depth, mu, logvar, target, b, image):
    kl = jnp.mean(-0.5 * jnp.sum(1.0 + logvar - mu ** 2 - jnp.exp(logvar), axis=1))
    bc = jnp.maximum(b, 1e-6)
    recon = jnp.mean(jnp.mean(jnp.abs(depth - target) / bc + jnp.log(bc), axis=(2, 3)))
    dIx = image[:, :, :, :-1] - image[:, :, :, 1:]
    dIy = image[:, :, :-1, :] - image[:, :, 1:, :]
    dDx = depth[:, :, :, :-1] - depth[:, :, :, 1:]
    dDy = depth[:, :, :-1, :] - depth[:, :, 1:, :]
    wx = jnp.exp(-jnp.mean(jnp.abs(dIx), axis=1, keepdims=True))
    wy = jnp.exp(-jnp.mean(jnp.abs(dIy), axis=1, keepdims=True))
    edge = jnp.mean(jnp.abs(dDx) * wx) + jnp.mean(jnp.abs(dDy) * wy)
    return kl, recon, edge


def _assert_close(name, got, want, atol, rtol):
    got = float(got)
    want = float(want)
    assert abs(got - want) <= atol + rtol * abs(want), (
        f"{name}: got {got}, want {want}")


if __name__ == "__main__":
    key = jax.random.PRNGKey(0)
    k1, k2, k3, k4, k5, k6 = jax.random.split(key, 6)

    N, C_IMG, H, W, LATENT = 2, 3, 16, 16, 32

    depth = jax.random.normal(k1, (N, 1, H, W), dtype=jnp.float32)
    target = jax.random.normal(k2, (N, 1, H, W), dtype=jnp.float32)
    b = jax.nn.softplus(jax.random.normal(k3, (N, 1, H, W), dtype=jnp.float32)) + 0.1
    image = jax.random.normal(k4, (N, C_IMG, H, W), dtype=jnp.float32)
    mu = jax.random.normal(k5, (N, LATENT), dtype=jnp.float32)
    logvar = 0.1 * jax.random.normal(k6, (N, LATENT), dtype=jnp.float32)

    losses = criterion_forward(depth, mu, logvar, target, b=b, image=image)
    losses = {k: jax.block_until_ready(v) for k, v in losses.items()}

    # correctness check vs pure-JAX reference
    kl_ref, recon_ref, edge_ref = _reference(depth, mu, logvar, target, b, image)
    _assert_close("kl_div", losses["kl_div"], kl_ref, atol=1e-3, rtol=1e-4)
    # recon uses approx reciprocal (EUP) -> looser tolerance
    _assert_close("recon_loss", losses["recon_loss"], recon_ref, atol=1e-2, rtol=1e-2)
    _assert_close("edgeaware_loss", losses["edgeaware_loss"], edge_ref,
                  atol=1e-3, rtol=1e-3)
    assert float(losses["uncertaintyaware_loss"]) == 0.0

    # bf16 streaming path (halves HBM bytes; math still f32 inside the kernel)
    losses_bf16 = criterion_forward(
        depth.astype(jnp.bfloat16), mu, logvar, target.astype(jnp.bfloat16),
        b=b.astype(jnp.bfloat16), image=image.astype(jnp.bfloat16))
    losses_bf16 = {k: jax.block_until_ready(v) for k, v in losses_bf16.items()}
    for k, v in losses_bf16.items():
        assert bool(jnp.isfinite(v)), f"bf16 path produced non-finite {k}"

    print("KERNEL_OK")
</pallas_src>

<mosaic_0001>
module attributes {stable_mosaic.version = 11 : i64} {
  func.func @kernel(%arg0: i32, %arg1: memref<1x1x32xf32, #tpu.memory_space<vmem>>, %arg2: memref<1x1x32xf32, #tpu.memory_space<vmem>>, %arg3: memref<1x1x16x16xf32, #tpu.memory_space<vmem>>, %arg4: memref<1x1x16x16xf32, #tpu.memory_space<vmem>>, %arg5: memref<1x1x16x16xf32, #tpu.memory_space<vmem>>, %arg6: memref<1x3x16x16xf32, #tpu.memory_space<vmem>>, %arg7: memref<1x1x4xf32, #tpu.memory_space<smem>>) attributes {dimension_semantics = [#tpu.dimension_semantics<parallel>], iteration_bounds = array<i64: 2>, scalar_prefetch = 0 : i64, scratch_operands = 0 : i64, tpu.core_type = #tpu.core_type<tc>, window_params = [{transform_indices = @transform_0, window_bounds = array<i64: 1, 1, 32>}, {transform_indices = @transform_1, window_bounds = array<i64: 1, 1, 32>}, {transform_indices = @transform_2, window_bounds = array<i64: 1, 1, 16, 16>}, {transform_indices = @transform_3, window_bounds = array<i64: 1, 1, 16, 16>}, {transform_indices = @transform_4, window_bounds = array<i64: 1, 1, 16, 16>}, {transform_indices = @transform_5, window_bounds = array<i64: 1, 3, 16, 16>}, {transform_indices = @transform_6, window_bounds = array<i64: 1, 1, 4>}]} {
    %c0 = arith.constant 0 : index
    %c0_0 = arith.constant 0 : index
    %c0_1 = arith.constant 0 : index
    %0 = vector.load %arg1[%c0, %c0_0, %c0_1] : memref<1x1x32xf32, #tpu.memory_space<vmem>>, vector<1x1x32xf32>
    %c0_2 = arith.constant 0 : index
    %c0_3 = arith.constant 0 : index
    %c0_4 = arith.constant 0 : index
    %1 = vector.load %arg2[%c0_2, %c0_3, %c0_4] : memref<1x1x32xf32, #tpu.memory_space<vmem>>, vector<1x1x32xf32>
    %cst = arith.constant 1.000000e+00 : f32
    %2 = vector.broadcast %cst : f32 to vector<1x1x32xf32>
    %3 = arith.addf %2, %1 : vector<1x1x32xf32>
    %4 = arith.mulf %0, %0 : vector<1x1x32xf32>
    %5 = arith.subf %3, %4 : vector<1x1x32xf32>
    %6 = math.exp %1 : vector<1x1x32xf32>
    %7 = arith.subf %5, %6 : vector<1x1x32xf32>
    %8 = vector.shape_cast %7 : vector<1x1x32xf32> to vector<1x1x1x32xf32>
    %cst_5 = arith.constant dense<0.000000e+00> : vector<1xf32>
    %9 = vector.multi_reduction <add>, %8, %cst_5 [1, 2, 3] : vector<1x1x1x32xf32> to vector<1xf32>
    %10 = vector.shape_cast %9 : vector<1xf32> to vector<1x1x1x1xf32>
    %11 = vector.extract %10[0, 0, 0, 0] : f32 from vector<1x1x1x1xf32>
    %c0_6 = arith.constant 0 : index
    %c0_7 = arith.constant 0 : index
    %c0_8 = arith.constant 0 : index
    %c0_9 = arith.constant 0 : index
    %12 = vector.load %arg3[%c0_6, %c0_7, %c0_8, %c0_9] : memref<1x1x16x16xf32, #tpu.memory_space<vmem>>, vector<1x1x16x16xf32>
    %13 = vector.shape_cast %12 : vector<1x1x16x16xf32> to vector<16x16xf32>
    %c0_10 = arith.constant 0 : index
    %c0_11 = arith.constant 0 : index
    %c0_12 = arith.constant 0 : index
    %c0_13 = arith.constant 0 : index
    %14 = vector.load %arg4[%c0_10, %c0_11, %c0_12, %c0_13] : memref<1x1x16x16xf32, #tpu.memory_space<vmem>>, vector<1x1x16x16xf32>
    %15 = vector.shape_cast %14 : vector<1x1x16x16xf32> to vector<16x16xf32>
    %16 = arith.subf %13, %15 : vector<16x16xf32>
    %17 = math.absf %16 : vector<16x16xf32>
    %c0_14 = arith.constant 0 : index
    %c0_15 = arith.constant 0 : index
    %c0_16 = arith.constant 0 : index
    %c0_17 = arith.constant 0 : index
    %18 = vector.load %arg5[%c0_14, %c0_15, %c0_16, %c0_17] : memref<1x1x16x16xf32, #tpu.memory_space<vmem>>, vector<1x1x16x16xf32>
    %19 = vector.shape_cast %18 : vector<1x1x16x16xf32> to vector<16x16xf32>
    %cst_18 = arith.constant 9.99999997E-7 : f32
    %20 = vector.broadcast %cst_18 : f32 to vector<16x16xf32>
    %21 = arith.maximumf %19, %20 : vector<16x16xf32>
    %22 = tpu.reciprocal %21 {approx = true} : vector<16x16xf32> -> vector<16x16xf32>
    %23 = arith.mulf %17, %22 : vector<16x16xf32>
    %24 = math.log %21 : vector<16x16xf32>
    %25 = arith.addf %23, %24 : vector<16x16xf32>
    %26 = vector.shape_cast %25 : vector<16x16xf32> to vector<1x16x16xf32>
    %cst_19 = arith.constant dense<0.000000e+00> : vector<1xf32>
    %27 = vector.multi_reduction <add>, %26, %cst_19 [1, 2] : vector<1x16x16xf32> to vector<1xf32>
    %28 = vector.shape_cast %27 : vector<1xf32> to vector<1x1x1xf32>
    %29 = vector.extract %28[0, 0, 0] : f32 from vector<1x1x1xf32>
    %30 = tpu.iota {dimensions = array<i32: 1>} : vector<16x16xi32>
    %c15_i32 = arith.constant 15 : i32
    %31 = vector.broadcast %c15_i32 : i32 to vector<16x16xi32>
    %32 = arith.cmpi slt, %30, %31 : vector<16x16xi32>
    %33 = tpu.iota {dimensions = array<i32: 0>} : vector<16x16xi32>
    %c15_i32_20 = arith.constant 15 : i32
    %34 = vector.broadcast %c15_i32_20 : i32 to vector<16x16xi32>
    %35 = arith.cmpi slt, %33, %34 : vector<16x16xi32>
    %c15_i32_21 = arith.constant 15 : i32
    %36 = tpu.dynamic_rotate %13 by %c15_i32_21 dim 1 : vector<16x16xf32>, i32 -> vector<16x16xf32>
    %37 = arith.subf %13, %36 : vector<16x16xf32>
    %c15_i32_22 = arith.constant 15 : i32
    %38 = tpu.dynamic_rotate %13 by %c15_i32_22 dim 0 : vector<16x16xf32>, i32 -> vector<16x16xf32>
    %39 = arith.subf %13, %38 : vector<16x16xf32>
    %cst_23 = arith.constant 0.000000e+00 : f32
    %40 = vector.broadcast %cst_23 : f32 to vector<16x16xf32>
    %cst_24 = arith.constant 0.000000e+00 : f32
    %41 = vector.broadcast %cst_24 : f32 to vector<16x16xf32>
    %c0_25 = arith.constant 0 : index
    %c0_26 = arith.constant 0 : index
    %c0_27 = arith.constant 0 : index
    %c0_28 = arith.constant 0 : index
    %42 = vector.load %arg6[%c0_25, %c0_26, %c0_27, %c0_28] : memref<1x3x16x16xf32, #tpu.memory_space<vmem>>, vector<1x1x16x16xf32>
    %43 = vector.shape_cast %42 : vector<1x1x16x16xf32> to vector<16x16xf32>
    %c15_i32_29 = arith.constant 15 : i32
    %44 = tpu.dynamic_rotate %43 by %c15_i32_29 dim 1 : vector<16x16xf32>, i32 -> vector<16x16xf32>
    %45 = arith.subf %43, %44 : vector<16x16xf32>
    %46 = math.absf %45 : vector<16x16xf32>
    %47 = arith.addf %40, %46 : vector<16x16xf32>
    %c15_i32_30 = arith.constant 15 : i32
    %48 = tpu.dynamic_rotate %43 by %c15_i32_30 dim 0 : vector<16x16xf32>, i32 -> vector<16x16xf32>
    %49 = arith.subf %43, %48 : vector<16x16xf32>
    %50 = math.absf %49 : vector<16x16xf32>
    %51 = arith.addf %41, %50 : vector<16x16xf32>
    %c0_31 = arith.constant 0 : index
    %c1 = arith.constant 1 : index
    %c0_32 = arith.constant 0 : index
    %c0_33 = arith.constant 0 : index
    %52 = vector.load %arg6[%c0_31, %c1, %c0_32, %c0_33] : memref<1x3x16x16xf32, #tpu.memory_space<vmem>>, vector<1x1x16x16xf32>
    %53 = vector.shape_cast %52 : vector<1x1x16x16xf32> to vector<16x16xf32>
    %c15_i32_34 = arith.constant 15 : i32
    %54 = tpu.dynamic_rotate %53 by %c15_i32_34 dim 1 : vector<16x16xf32>, i32 -> vector<16x16xf32>
    %55 = arith.subf %53, %54 : vector<16x16xf32>
    %56 = math.absf %55 : vector<16x16xf32>
    %57 = arith.addf %47, %56 : vector<16x16xf32>
    %c15_i32_35 = arith.constant 15 : i32
    %58 = tpu.dynamic_rotate %53 by %c15_i32_35 dim 0 : vector<16x16xf32>, i32 -> vector<16x16xf32>
    %59 = arith.subf %53, %58 : vector<16x16xf32>
    %60 = math.absf %59 : vector<16x16xf32>
    %61 = arith.addf %51, %60 : vector<16x16xf32>
    %c0_36 = arith.constant 0 : index
    %c2 = arith.constant 2 : index
    %c0_37 = arith.constant 0 : index
    %c0_38 = arith.constant 0 : index
    %62 = vector.load %arg6[%c0_36, %c2, %c0_37, %c0_38] : memref<1x3x16x16xf32, #tpu.memory_space<vmem>>, vector<1x1x16x16xf32>
    %63 = vector.shape_cast %62 : vector<1x1x16x16xf32> to vector<16x16xf32>
    %c15_i32_39 = arith.constant 15 : i32
    %64 = tpu.dynamic_rotate %63 by %c15_i32_39 dim 1 : vector<16x16xf32>, i32 -> vector<16x16xf32>
    %65 = arith.subf %63, %64 : vector<16x16xf32>
    %66 = math.absf %65 : vector<16x16xf32>
    %67 = arith.addf %57, %66 : vector<16x16xf32>
    %c15_i32_40 = arith.constant 15 : i32
    %68 = tpu.dynamic_rotate %63 by %c15_i32_40 dim 0 : vector<16x16xf32>, i32 -> vector<16x16xf32>
    %69 = arith.subf %63, %68 : vector<16x16xf32>
    %70 = math.absf %69 : vector<16x16xf32>
    %71 = arith.addf %61, %70 : vector<16x16xf32>
    %cst_41 = arith.constant 0.000000e+00 : f32
    %72 = vector.broadcast %cst_41 : f32 to vector<16x16xf32>
    %73 = arith.subf %72, %67 : vector<16x16xf32>
    %cst_42 = arith.constant 0.333333343 : f32
    %74 = vector.broadcast %cst_42 : f32 to vector<16x16xf32>
    %75 = arith.mulf %73, %74 : vector<16x16xf32>
    %76 = math.exp %75 : vector<16x16xf32>
    %cst_43 = arith.constant 0.000000e+00 : f32
    %77 = vector.broadcast %cst_43 : f32 to vector<16x16xf32>
    %78 = arith.subf %77, %71 : vector<16x16xf32>
    %cst_44 = arith.constant 0.333333343 : f32
    %79 = vector.broadcast %cst_44 : f32 to vector<16x16xf32>
    %80 = arith.mulf %78, %79 : vector<16x16xf32>
    %81 = math.exp %80 : vector<16x16xf32>
    %82 = math.absf %37 : vector<16x16xf32>
    %83 = arith.mulf %82, %76 : vector<16x16xf32>
    %cst_45 = arith.constant 0.000000e+00 : f32
    %84 = vector.broadcast %cst_45 : f32 to vector<16x16xf32>
    %85 = arith.select %32, %83, %84 : vector<16x16xi1>, vector<16x16xf32>
    %86 = vector.shape_cast %85 : vector<16x16xf32> to vector<1x16x16xf32>
    %cst_46 = arith.constant dense<0.000000e+00> : vector<1xf32>
    %87 = vector.multi_reduction <add>, %86, %cst_46 [1, 2] : vector<1x16x16xf32> to vector<1xf32>
    %88 = vector.shape_cast %87 : vector<1xf32> to vector<1x1x1xf32>
    %89 = vector.extract %88[0, 0, 0] : f32 from vector<1x1x1xf32>
    %90 = math.absf %39 : vector<16x16xf32>
    %91 = arith.mulf %90, %81 : vector<16x16xf32>
    %cst_47 = arith.constant 0.000000e+00 : f32
    %92 = vector.broadcast %cst_47 : f32 to vector<16x16xf32>
    %93 = arith.select %35, %91, %92 : vector<16x16xi1>, vector<16x16xf32>
    %94 = vector.shape_cast %93 : vector<16x16xf32> to vector<1x16x16xf32>
    %cst_48 = arith.constant dense<0.000000e+00> : vector<1xf32>
    %95 = vector.multi_reduction <add>, %94, %cst_48 [1, 2] : vector<1x16x16xf32> to vector<1xf32>
    %96 = vector.shape_cast %95 : vector<1xf32> to vector<1x1x1xf32>
    %97 = vector.extract %96[0, 0, 0] : f32 from vector<1x1x1xf32>
    %c0_49 = arith.constant 0 : index
    %c0_50 = arith.constant 0 : index
    %c0_51 = arith.constant 0 : index
    %98 = memref.load %arg7[%c0_49, %c0_50, %c0_51] : memref<1x1x4xf32, #tpu.memory_space<smem>>
    memref.store %11, %arg7[%c0_49, %c0_50, %c0_51] : memref<1x1x4xf32, #tpu.memory_space<smem>>
    %c0_52 = arith.constant 0 : index
    %c0_53 = arith.constant 0 : index
    %c1_54 = arith.constant 1 : index
    %99 = memref.load %arg7[%c0_52, %c0_53, %c1_54] : memref<1x1x4xf32, #tpu.memory_space<smem>>
    memref.store %29, %arg7[%c0_52, %c0_53, %c1_54] : memref<1x1x4xf32, #tpu.memory_space<smem>>
    %c0_55 = arith.constant 0 : index
    %c0_56 = arith.constant 0 : index
    %c2_57 = arith.constant 2 : index
    %100 = memref.load %arg7[%c0_55, %c0_56, %c2_57] : memref<1x1x4xf32, #tpu.memory_space<smem>>
    memref.store %89, %arg7[%c0_55, %c0_56, %c2_57] : memref<1x1x4xf32, #tpu.memory_space<smem>>
    %c0_58 = arith.constant 0 : index
    %c0_59 = arith.constant 0 : index
    %c3 = arith.constant 3 : index
    %101 = memref.load %arg7[%c0_58, %c0_59, %c3] : memref<1x1x4xf32, #tpu.memory_space<smem>>
    memref.store %97, %arg7[%c0_58, %c0_59, %c3] : memref<1x1x4xf32, #tpu.memory_space<smem>>
    return
  }
  func.func @transform_0(%arg0: i32) -> (i32, i32, i32) {
    %c0_i32 = arith.constant 0 : i32
    %c0_i32_0 = arith.constant 0 : i32
    %c0_i32_1 = arith.constant 0 : i32
    return %arg0, %c0_i32, %c0_i32_0 : i32, i32, i32
  }
  func.func @transform_1(%arg0: i32) -> (i32, i32, i32) {
    %c0_i32 = arith.constant 0 : i32
    %c0_i32_0 = arith.constant 0 : i32
    %c0_i32_1 = arith.constant 0 : i32
    return %arg0, %c0_i32, %c0_i32_0 : i32, i32, i32
  }
  func.func @transform_2(%arg0: i32) -> (i32, i32, i32, i32) {
    %c0_i32 = arith.constant 0 : i32
    %c0_i32_0 = arith.constant 0 : i32
    %c0_i32_1 = arith.constant 0 : i32
    %c0_i32_2 = arith.constant 0 : i32
    return %arg0, %c0_i32, %c0_i32_0, %c0_i32_1 : i32, i32, i32, i32
  }
  func.func @transform_3(%arg0: i32) -> (i32, i32, i32, i32) {
    %c0_i32 = arith.constant 0 : i32
    %c0_i32_0 = arith.constant 0 : i32
    %c0_i32_1 = arith.constant 0 : i32
    %c0_i32_2 = arith.constant 0 : i32
    return %arg0, %c0_i32, %c0_i32_0, %c0_i32_1 : i32, i32, i32, i32
  }
  func.func @transform_4(%arg0: i32) -> (i32, i32, i32, i32) {
    %c0_i32 = arith.constant 0 : i32
    %c0_i32_0 = arith.constant 0 : i32
    %c0_i32_1 = arith.constant 0 : i32
    %c0_i32_2 = arith.constant 0 : i32
    return %arg0, %c0_i32, %c0_i32_0, %c0_i32_1 : i32, i32, i32, i32
  }
  func.func @transform_5(%arg0: i32) -> (i32, i32, i32, i32) {
    %c0_i32 = arith.constant 0 : i32
    %c0_i32_0 = arith.constant 0 : i32
    %c0_i32_1 = arith.constant 0 : i32
    %c0_i32_2 = arith.constant 0 : i32
    return %arg0, %c0_i32, %c0_i32_0, %c0_i32_1 : i32, i32, i32, i32
  }
  func.func @transform_6(%arg0: i32) -> (i32, i32, i32) {
    %c0_i32 = arith.constant 0 : i32
    %c0_i32_0 = arith.constant 0 : i32
    %c0_i32_1 = arith.constant 0 : i32
    return %arg0, %c0_i32, %c0_i32_0 : i32, i32, i32
  }
}

</mosaic_0001>

<llo_original>
// kernel: tpu_custom_call.1
$region0: #{tpu_custom_call.1}
  #allocation0 [shape = 'u32[]', space=smem, size = 0x4, offset = 0x4, fixed_abs, tag = 'smem constant byte address 0x4 - core index']
  #allocation1 [shape = 'u32[144,128]{1,0:T(1,128)}', space=vmem, size = 0x12000, scoped, tag = 'internal scratch']
  %s0 = inlined_call_operand.hbm [shape: f32[2,1,32], index: 0, kind: input, shape index: {}]
  %s1 = inlined_call_operand.vmem [shape: f32[2,1,32], index: 1, kind: input, shape index: {}]
  %s2 = inlined_call_operand.hbm [shape: f32[2,1,16,16], index: 2, kind: input, shape index: {}]
  %s3 = inlined_call_operand.hbm [shape: f32[2,1,16,16], index: 3, kind: input, shape index: {}]
  %s4 = inlined_call_operand.hbm [shape: f32[2,1,16,16], index: 4, kind: input, shape index: {}]
  %s5 = inlined_call_operand.hbm [shape: f32[2,3,16,16], index: 5, kind: input, shape index: {}]
  %s6 = inlined_call_operand.hbm [shape: f32[2,1,4], index: 6, kind: output, shape index: {}]
  %s7 = sld [smem:[#allocation0]]
  $region77: #{tpu_custom_call.1} parent=0
    _
  %s9 = ssub.s32 1, %s7
  %s10 = scalar_select 0, %s9, %s7
  $region1: #{tpu_custom_call.1} parent=0
    #allocation2 [shape = 'u8[1024]{0}', space=vmem, size = 0x400, scoped, tag = 'input window, operand 0']
    #allocation3 [shape = 's32[2]{0}', space=sflag, size = 0x8, scoped, tag = 'scoped memory for tpu_custom_call.1']
    #allocation4 [shape = 's32[2]{0}', space=sflag, size = 0x8, scoped, tag = 'scoped memory for tpu_custom_call.1']
    #allocation5 [shape = 'u8[16384]{0}', space=vmem, size = 0x4000, scoped, tag = 'input window, operand 2']
    #allocation6 [shape = 's32[2]{0}', space=sflag, size = 0x8, scoped, tag = 'scoped memory for tpu_custom_call.1']
    #allocation7 [shape = 'u8[16384]{0}', space=vmem, size = 0x4000, scoped, tag = 'input window, operand 3']
    #allocation8 [shape = 'u8[16384]{0}', space=vmem, size = 0x4000, scoped, tag = 'input window, operand 4']
    #allocation9 [shape = 's32[2]{0}', space=sflag, size = 0x8, scoped, tag = 'scoped memory for tpu_custom_call.1']
    #allocation10 [shape = 'u8[49152]{0}', space=vmem, size = 0xc000, scoped, tag = 'input window, operand 5']
    #allocation11 [shape = 'u8[1024]{0}', space=smem, size = 0x400, scoped, tag = 'output window, operand 0']
    %11 = vsyncpa [#allocation3], 0
    %s12 = scalar_lea.sflag [#allocation3], 1
    %13 = vsyncpa %s12, 0
    %14 = vsyncpa [#allocation6], 0
    %s15 = scalar_lea.sflag [#allocation6], 1
    %16 = vsyncpa %s15, 0
    %17 = vsyncpa [#allocation9], 0
    %s18 = scalar_lea.sflag [#allocation9], 1
    %19 = vsyncpa %s18, 0
    %20 = vsyncpa [#allocation4], 0
    %s21 = scalar_lea.sflag [#allocation4], 1
    %22 = vsyncpa %s21, 0
    loop: start=0, step=1, limit=4
    $region2: #{tpu_custom_call.1} parent=1 // loop_pre_header
      _
    $region3: #{tpu_custom_call.1} parent=1 // loop_header
      %s24 = sphi 0, %s28
      %p25 = scmp.ge.s32.totalorder %s24, 4
      %s34 = sphi 0, %s36
      %s37 = sphi 0, %s34
      %s38 = sphi 0, %s37
      %s54 = sphi 0, %s38
      %s60 = sphi 0, %s62
      %s63 = sphi 0, %s60
      %s64 = sphi 0, %s63
      %s80 = sphi 0, %s64
      %s86 = sphi 0, %s88
      %s89 = sphi 0, %s86
      %s90 = sphi 0, %s89
      %s106 = sphi 0, %s90
      %s112 = sphi 0, %s114
      %s115 = sphi 0, %s112
      %s116 = sphi 0, %s115
      %s132 = sphi 0, %s116
      %s138 = sphi 0, %s140
      %s141 = sphi 0, %s138
      %s142 = sphi 0, %s141
      %s158 = sphi 0, %s142
      %s164 = sphi 0, %s166
      %s167 = sphi 0, %s164
      %s168 = sphi 0, %s167
      %s184 = sphi 0, %s168
      %s190 = sphi 0, %s192
      %s193 = sphi 0, %s190
      %s194 = sphi 0, %s193
      %s210 = sphi 0, %s194
    $region4: #{tpu_custom_call.1} parent=1 // loop_header_branch
      %27 = sbr.rel (%p25) target = $region8
    $region5: #{tpu_custom_call.1} parent=1 // loop_body
      %s29 = ssub.s32 %s24, 1
      %s30 = ssub.s32 %s24, 2
      %s31 = sadd.s32 %s24, 1
      %s32 = ssub.s32 %s24, %s31
      %p33 = scmp.eq.s32.totalorder %s32, 0
      %s35 = sadd.s32 %s34, 1
      %s36 = scalar_select %p33, %s34, %s35
      %p39 = pneg %p33
      %p40 = scmp.eq.s32.totalorder %s24, 1
      %p41 = por %p39, %p40
      %p42 = scmp.ne.s32.totalorder %s34, %s37
      %p43 = scmp.eq.s32.totalorder %s24, 0
      %p44 = por %p42, %p43
      %p45 = scmp.ne.s32.totalorder %s34, %s37
      %p46 = scmp.eq.s32.totalorder %s29, 1
      %p47 = por %p45, %p46
      %p48 = scmp.ne.s32.totalorder %s37, %s38
      %p49 = scmp.eq.s32.totalorder %s29, 0
      %p50 = por %p48, %p49
      %p51 = scmp.ne.s32.totalorder %s37, %s38
      %p52 = scmp.eq.s32.totalorder %s30, 1
      %p53 = por %p51, %p52
      %p55 = scmp.ne.s32.totalorder %s38, %s54
      %p56 = scmp.eq.s32.totalorder %s30, 0
      %p57 = por %p55, %p56
      %s58 = ssub.s32 %s24, %s31
      %p59 = scmp.eq.s32.totalorder %s58, 0
      %s61 = sadd.s32 %s60, 1
      %s62 = scalar_select %p59, %s60, %s61
      %p65 = pneg %p59
      %p66 = scmp.eq.s32.totalorder %s24, 1
      %p67 = por %p65, %p66
      %p68 = scmp.ne.s32.totalorder %s60, %s63
      %p69 = scmp.eq.s32.totalorder %s24, 0
      %p70 = por %p68, %p69
      %p71 = scmp.ne.s32.totalorder %s60, %s63
      %p72 = scmp.eq.s32.totalorder %s29, 1
      %p73 = por %p71, %p72
      %p74 = scmp.ne.s32.totalorder %s63, %s64
      %p75 = scmp.eq.s32.totalorder %s29, 0
      %p76 = por %p74, %p75
      %p77 = scmp.ne.s32.totalorder %s63, %s64
      %p78 = scmp.eq.s32.totalorder %s30, 1
      %p79 = por %p77, %p78
      %p81 = scmp.ne.s32.totalorder %s64, %s80
      %p82 = scmp.eq.s32.totalorder %s30, 0
      %p83 = por %p81, %p82
      %s84 = ssub.s32 %s24, %s31
      %p85 = scmp.eq.s32.totalorder %s84, 0
      %s87 = sadd.s32 %s86, 1
      %s88 = scalar_select %p85, %s86, %s87
      %p91 = pneg %p85
      %p92 = scmp.eq.s32.totalorder %s24, 1
      %p93 = por %p91, %p92
      %p94 = scmp.ne.s32.totalorder %s86, %s89
      %p95 = scmp.eq.s32.totalorder %s24, 0
      %p96 = por %p94, %p95
      %p97 = scmp.ne.s32.totalorder %s86, %s89
      %p98 = scmp.eq.s32.totalorder %s29, 1
      %p99 = por %p97, %p98
      %p100 = scmp.ne.s32.totalorder %s89, %s90
      %p101 = scmp.eq.s32.totalorder %s29, 0
      %p102 = por %p100, %p101
      %p103 = scmp.ne.s32.totalorder %s89, %s90
      %p104 = scmp.eq.s32.totalorder %s30, 1
      %p105 = por %p103, %p104
      %p107 = scmp.ne.s32.totalorder %s90, %s106
      %p108 = scmp.eq.s32.totalorder %s30, 0
      %p109 = por %p107, %p108
      %s110 = ssub.s32 %s24, %s31
      %p111 = scmp.eq.s32.totalorder %s110, 0
      %s113 = sadd.s32 %s112, 1
      %s114 = scalar_select %p111, %s112, %s113
      %p117 = pneg %p111
      %p118 = scmp.eq.s32.totalorder %s24, 1
      %p119 = por %p117, %p118
      %p120 = scmp.ne.s32.totalorder %s112, %s115
      %p121 = scmp.eq.s32.totalorder %s24, 0
      %p122 = por %p120, %p121
      %p123 = scmp.ne.s32.totalorder %s112, %s115
      %p124 = scmp.eq.s32.totalorder %s29, 1
      %p125 = por %p123, %p124
      %p126 = scmp.ne.s32.totalorder %s115, %s116
      %p127 = scmp.eq.s32.totalorder %s29, 0
      %p128 = por %p126, %p127
      %p129 = scmp.ne.s32.totalorder %s115, %s116
      %p130 = scmp.eq.s32.totalorder %s30, 1
      %p131 = por %p129, %p130
      %p133 = scmp.ne.s32.totalorder %s116, %s132
      %p134 = scmp.eq.s32.totalorder %s30, 0
      %p135 = por %p133, %p134
      %s136 = ssub.s32 %s24, %s31
      %p137 = scmp.eq.s32.totalorder %s136, 0
      %s139 = sadd.s32 %s138, 1
      %s140 = scalar_select %p137, %s138, %s139
      %p143 = pneg %p137
      %p144 = scmp.eq.s32.totalorder %s24, 1
      %p145 = por %p143, %p144
      %p146 = scmp.ne.s32.totalorder %s138, %s141
      %p147 = scmp.eq.s32.totalorder %s24, 0
      %p148 = por %p146, %p147
      %p149 = scmp.ne.s32.totalorder %s138, %s141
      %p150 = scmp.eq.s32.totalorder %s29, 1
      %p151 = por %p149, %p150
      %p152 = scmp.ne.s32.totalorder %s141, %s142
      %p153 = scmp.eq.s32.totalorder %s29, 0
      %p154 = por %p152, %p153
      %p155 = scmp.ne.s32.totalorder %s141, %s142
      %p156 = scmp.eq.s32.totalorder %s30, 1
      %p157 = por %p155, %p156
      %p159 = scmp.ne.s32.totalorder %s142, %s158
      %p160 = scmp.eq.s32.totalorder %s30, 0
      %p161 = por %p159, %p160
      %s162 = ssub.s32 %s24, %s31
      %p163 = scmp.eq.s32.totalorder %s162, 0
      %s165 = sadd.s32 %s164, 1
      %s166 = scalar_select %p163, %s164, %s165
      %p169 = pneg %p163
      %p170 = scmp.eq.s32.totalorder %s24, 1
      %p171 = por %p169, %p170
      %p172 = scmp.ne.s32.totalorder %s164, %s167
      %p173 = scmp.eq.s32.totalorder %s24, 0
      %p174 = por %p172, %p173
      %p175 = scmp.ne.s32.totalorder %s164, %s167
      %p176 = scmp.eq.s32.totalorder %s29, 1
      %p177 = por %p175, %p176
      %p178 = scmp.ne.s32.totalorder %s167, %s168
      %p179 = scmp.eq.s32.totalorder %s29, 0
      %p180 = por %p178, %p179
      %p181 = scmp.ne.s32.totalorder %s167, %s168
      %p182 = scmp.eq.s32.totalorder %s30, 1
      %p183 = por %p181, %p182
      %p185 = scmp.ne.s32.totalorder %s168, %s184
      %p186 = scmp.eq.s32.totalorder %s30, 0
      %p187 = por %p185, %p186
      %s188 = ssub.s32 %s24, %s31
      %p189 = scmp.eq.s32.totalorder %s188, 0
      %s191 = sadd.s32 %s190, 1
      %s192 = scalar_select %p189, %s190, %s191
      %p195 = pneg %p189
      %p196 = scmp.eq.s32.totalorder %s24, 1
      %p197 = por %p195, %p196
      %p198 = scmp.ne.s32.totalorder %s190, %s193
      %p199 = scmp.eq.s32.totalorder %s24, 0
      %p200 = por %p198, %p199
      %p201 = scmp.ne.s32.totalorder %s190, %s193
      %p202 = scmp.eq.s32.totalorder %s29, 1
      %p203 = por %p201, %p202
      %p204 = scmp.ne.s32.totalorder %s193, %s194
      %p205 = scmp.eq.s32.totalorder %s29, 0
      %p206 = por %p204, %p205
      %p207 = scmp.ne.s32.totalorder %s193, %s194
      %p208 = scmp.eq.s32.totalorder %s30, 1
      %p209 = por %p207, %p208
      %p211 = scmp.ne.s32.totalorder %s194, %s210
      %p212 = scmp.eq.s32.totalorder %s30, 0
      %p213 = por %p211, %p212
      %p214 = scmp.le.s32.totalorder 1, %s24
      %p215 = scmp.lt.s32.totalorder %s24, 3
      %p216 = pnand %p214, %p215
      %p217 = pneg %p216
      // Predicated region
      $region9: #{tpu_custom_call.1} parent=5 // pred_check
        _
      $region10: #{tpu_custom_call.1} parent=5 // pred_check_branch
        %219 = sbr.rel (%p216) target = $region12
      $region11: #{tpu_custom_call.1} parent=5 // pred_region
        %s220 = ssub.s32 %s24, 1
      $region12: #{tpu_custom_call.1} parent=5 // pred_fallthru
        _
      %p221 = scmp.lt.s32.totalorder %s24, 2
      // Predicated region
      $region13: #{tpu_custom_call.1} parent=5 // pred_check
        %p222 = pneg %p221
      $region14: #{tpu_custom_call.1} parent=5 // pred_check_branch
        %224 = sbr.rel (%p222) target = $region16
      $region15: #{tpu_custom_call.1} parent=5 // pred_region
        // Predicated region
        $region17: #{tpu_custom_call.1} parent=15 // pred_check
          %p225 = pneg %p44
        $region18: #{tpu_custom_call.1} parent=15 // pred_check_branch
          %227 = sbr.rel (%p225) target = $region20
        $region19: #{tpu_custom_call.1} parent=15 // pred_region
          %s228 = sand.u32 %s34, 1
          %s229 = scalar_lea.sflag [#allocation3], %s228
          %s230 = sand.u32 %s34, 1
          %s231 = scalar_lea.vmem [#allocation2], %s230
          %s233 = ssub.s32 16, 16
          %234 = vsyncadd %s229, %s233
          %s235 = smul.addr %s24, 16
          %s236 = scalar_lea.hbm %s0, %s235
          %s238 = sshll.u32 %s231, 4
          %s239 = int_to_ptr.vmem [resolvable:$true] %s238
          %241 = dma.hbm_to_vmem [thread:$0]  %s236, 16, %s239, %s229
        $region20: #{tpu_custom_call.1} parent=15 // pred_fallthru
          _
        // Predicated region
        $region21: #{tpu_custom_call.1} parent=15 // pred_check
          %p242 = pneg %p70
        $region22: #{tpu_custom_call.1} parent=15 // pred_check_branch
          %244 = sbr.rel (%p242) target = $region24
        $region23: #{tpu_custom_call.1} parent=15 // pred_region
          %p245 = scmp.lt.s32.totalorder %s24, 1
          %s246 = scalar_select %p245, %s24, 1
          %s247 = scalar_lea.vmem %s1, %s246
        $region24: #{tpu_custom_call.1} parent=15 // pred_fallthru
          _
        // Predicated region
        $region25: #{tpu_custom_call.1} parent=15 // pred_check
          %p248 = pneg %p96
        $region26: #{tpu_custom_call.1} parent=15 // pred_check_branch
          %250 = sbr.rel (%p248) target = $region28
        $region27: #{tpu_custom_call.1} parent=15 // pred_region
          %s251 = sand.u32 %s24, 1
          %s252 = scalar_lea.sflag [#allocation6], %s251
          %s253 = sand.u32 %s86, 1
          %s254 = smul.addr %s253, 16
          %s255 = scalar_lea.vmem [#allocation5], %s254
          %s257 = ssub.s32 256, 256
          %258 = vsyncadd %s252, %s257
          %s259 = smul.addr %s24, 2
          %s260 = smul.addr %s259, 128
          %s261 = scalar_lea.hbm %s2, %s260
          %s262 = sshll.u32 %s255, 4
          %s263 = int_to_ptr.vmem [resolvable:$true] %s262
          %268 = dma.hbm_to_vmem [thread:$0]  %s261, 256, %s263, %s252, 128, 128, 8
        $region28: #{tpu_custom_call.1} parent=15 // pred_fallthru
          _
        // Predicated region
        $region29: #{tpu_custom_call.1} parent=15 // pred_check
          %p269 = pneg %p122
        $region30: #{tpu_custom_call.1} parent=15 // pred_check_branch
          %271 = sbr.rel (%p269) target = $region32
        $region31: #{tpu_custom_call.1} parent=15 // pred_region
          %s272 = sand.u32 %s24, 1
          %s273 = scalar_lea.sflag [#allocation6], %s272
          %s274 = sand.u32 %s112, 1
          %s275 = smul.addr %s274, 16
          %s276 = scalar_lea.vmem [#allocation7], %s275
          %s278 = ssub.s32 256, 256
          %279 = vsyncadd %s273, %s278
          %s280 = smul.addr %s24, 2
          %s281 = smul.addr %s280, 128
          %s282 = scalar_lea.hbm %s3, %s281
          %s283 = sshll.u32 %s276, 4
          %s284 = int_to_ptr.vmem [resolvable:$true] %s283
          %289 = dma.hbm_to_vmem [thread:$0]  %s282, 256, %s284, %s273, 128, 128, 8
        $region32: #{tpu_custom_call.1} parent=15 // pred_fallthru
          _
        // Predicated region
        $region33: #{tpu_custom_call.1} parent=15 // pred_check
          %p290 = pneg %p148
        $region34: #{tpu_custom_call.1} parent=15 // pred_check_branch
          %292 = sbr.rel (%p290) target = $region36
        $region35: #{tpu_custom_call.1} parent=15 // pred_region
          %s293 = sand.u32 %s24, 1
          %s294 = scalar_lea.sflag [#allocation9], %s293
          %s295 = sand.u32 %s138, 1
          %s296 = smul.addr %s295, 16
          %s297 = scalar_lea.vmem [#allocation8], %s296
          %s299 = ssub.s32 256, 256
          %300 = vsyncadd %s294, %s299
          %s301 = smul.addr %s24, 2
          %s302 = smul.addr %s301, 128
          %s303 = scalar_lea.hbm %s4, %s302
          %s304 = sshll.u32 %s297, 4
          %s305 = int_to_ptr.vmem [resolvable:$true] %s304
          %310 = dma.hbm_to_vmem [thread:$0]  %s303, 256, %s305, %s294, 128, 128, 8
        $region36: #{tpu_custom_call.1} parent=15 // pred_fallthru
          _
        // Predicated region
        $region37: #{tpu_custom_call.1} parent=15 // pred_check
          %p311 = pneg %p174
        $region38: #{tpu_custom_call.1} parent=15 // pred_check_branch
          %313 = sbr.rel (%p311) target = $region40
        $region39: #{tpu_custom_call.1} parent=15 // pred_region
          %s314 = sand.u32 %s24, 1
          %s315 = scalar_lea.sflag [#allocation9], %s314
          %s316 = sand.u32 %s164, 1
          %s317 = smul.addr %s316, 48
          %s318 = scalar_lea.vmem [#allocation10], %s317
          %s320 = ssub.s32 768, 768
          %321 = vsyncadd %s315, %s320
          %s322 = smul.addr %s24, 6
          %s323 = smul.addr %s322, 128
          %s324 = scalar_lea.hbm %s5, %s323
          %s325 = sshll.u32 %s318, 4
          %s326 = int_to_ptr.vmem [resolvable:$true] %s325
          %331 = dma.hbm_to_vmem [thread:$0]  %s324, 768, %s326, %s315, 128, 128, 8
        $region40: #{tpu_custom_call.1} parent=15 // pred_fallthru
          _
      $region16: #{tpu_custom_call.1} parent=5 // pred_fallthru
        _
      %p332 = scmp.le.s32.totalorder 1, %s24
      %p333 = scmp.lt.s32.totalorder %s24, 3
      %p334 = pnand %p332, %p333
      %p335 = pneg %p334
      // Predicated region
      $region41: #{tpu_custom_call.1} parent=5 // pred_check
        _
      $region42: #{tpu_custom_call.1} parent=5 // pred_check_branch
        %337 = sbr.rel (%p334) target = $region44
      $region43: #{tpu_custom_call.1} parent=5 // pred_region
        %s338 = ssub.s32 %s24, 1
        %s339 = sand.u32 %s37, 1
        %s340 = scalar_lea.sflag [#allocation3], %s339
        %s341 = sand.u32 %s37, 1
        %s342 = scalar_lea.vmem [#allocation2], %s341
        // Predicated region
        $region45: #{tpu_custom_call.1} parent=43 // pred_check
          %p343 = pneg %p50
        $region46: #{tpu_custom_call.1} parent=43 // pred_check_branch
          %345 = sbr.rel (%p343) target = $region48
        $region47: #{tpu_custom_call.1} parent=43 // pred_region
          %346 = dma.done %s340, 16
        $region48: #{tpu_custom_call.1} parent=43 // pred_fallthru
          _
        %s347 = sand.u32 %s29, 1
        %s348 = scalar_lea.sflag [#allocation6], %s347
        %s349 = sand.u32 %s89, 1
        %s350 = smul.addr %s349, 16
        %s351 = scalar_lea.vmem [#allocation5], %s350
        // Predicated region
        $region49: #{tpu_custom_call.1} parent=43 // pred_check
          %p352 = pneg %p102
        $region50: #{tpu_custom_call.1} parent=43 // pred_check_branch
          %354 = sbr.rel (%p352) target = $region52
        $region51: #{tpu_custom_call.1} parent=43 // pred_region
          %355 = dma.done %s348, 256
        $region52: #{tpu_custom_call.1} parent=43 // pred_fallthru
          _
        %s356 = sand.u32 %s29, 1
        %s357 = scalar_lea.sflag [#allocation6], %s356
        %s358 = sand.u32 %s115, 1
        %s359 = smul.addr %s358, 16
        %s360 = scalar_lea.vmem [#allocation7], %s359
        // Predicated region
        $region53: #{tpu_custom_call.1} parent=43 // pred_check
          %p361 = pneg %p128
        $region54: #{tpu_custom_call.1} parent=43 // pred_check_branch
          %363 = sbr.rel (%p361) target = $region56
        $region55: #{tpu_custom_call.1} parent=43 // pred_region
          %364 = dma.done %s357, 256
        $region56: #{tpu_custom_call.1} parent=43 // pred_fallthru
          _
        %s365 = sand.u32 %s29, 1
        %s366 = scalar_lea.sflag [#allocation9], %s365
        %s367 = sand.u32 %s141, 1
        %s368 = smul.addr %s367, 16
        %s369 = scalar_lea.vmem [#allocation8], %s368
        // Predicated region
        $region57: #{tpu_custom_call.1} parent=43 // pred_check
          %p370 = pneg %p154
        $region58: #{tpu_custom_call.1} parent=43 // pred_check_branch
          %372 = sbr.rel (%p370) target = $region60
        $region59: #{tpu_custom_call.1} parent=43 // pred_region
          %373 = dma.done %s366, 256
        $region60: #{tpu_custom_call.1} parent=43 // pred_fallthru
          _
        %s374 = sand.u32 %s29, 1
        %s375 = scalar_lea.sflag [#allocation9], %s374
        %s376 = sand.u32 %s167, 1
        %s377 = smul.addr %s376, 48
        %s378 = scalar_lea.vmem [#allocation10], %s377
        // Predicated region
        $region61: #{tpu_custom_call.1} parent=43 // pred_check
          %p379 = pneg %p180
        $region62: #{tpu_custom_call.1} parent=43 // pred_check_branch
          %381 = sbr.rel (%p379) target = $region64
        $region63: #{tpu_custom_call.1} parent=43 // pred_region
          %382 = dma.done %s375, 768
        $region64: #{tpu_custom_call.1} parent=43 // pred_fallthru
          _
        %s383 = sand.u32 %s37, 1
        %s384 = scalar_lea.sflag [#allocation3], %s383
        %s385 = sand.u32 %s37, 1
        %s386 = scalar_lea.vmem [#allocation2], %s385
        %p387 = pneg %p50
        %p388 = pneg %p47
        %p389 = scmp.lt.s32.totalorder %s29, 1
        %s390 = scalar_select %p389, %s29, 1
        %s391 = scalar_lea.vmem %s1, %s390
        %p392 = pneg %p76
        %p393 = pneg %p73
        %s394 = sand.u32 %s29, 1
        %s395 = scalar_lea.sflag [#allocation6], %s394
        %s396 = sand.u32 %s89, 1
        %s397 = smul.addr %s396, 16
        %s398 = scalar_lea.vmem [#allocation5], %s397
        %p399 = pneg %p102
        %p400 = pneg %p99
        %s401 = sand.u32 %s29, 1
        %s402 = scalar_lea.sflag [#allocation6], %s401
        %s403 = sand.u32 %s115, 1
        %s404 = smul.addr %s403, 16
        %s405 = scalar_lea.vmem [#allocation7], %s404
        %p406 = pneg %p128
        %p407 = pneg %p125
        %s408 = sand.u32 %s29, 1
        %s409 = scalar_lea.sflag [#allocation9], %s408
        %s410 = sand.u32 %s141, 1
        %s411 = smul.addr %s410, 16
        %s412 = scalar_lea.vmem [#allocation8], %s411
        %p413 = pneg %p154
        %p414 = pneg %p151
        %s415 = sand.u32 %s29, 1
        %s416 = scalar_lea.sflag [#allocation9], %s415
        %s417 = sand.u32 %s167, 1
        %s418 = smul.addr %s417, 48
        %s419 = scalar_lea.vmem [#allocation10], %s418
        %p420 = pneg %p180
        %p421 = pneg %p177
        %p422 = pneg %p206
        %p423 = pneg %p203
        %s424 = sand.u32 %s193, 1
        %s425 = scalar_lea.sflag [#allocation4], %s424
        %s426 = sand.u32 %s193, 1
        %s427 = smul.addr %s426, 128
        %s428 = scalar_lea.smem [#allocation11], %s427
        %p429 = scmp.lt.s32.totalorder %s29, 1
        %s430 = scalar_select %p429, %s29, 1
        %s431 = scalar_lea.vmem %s1, %s430
        %v432 = vld [vmem:[%s342] sm:$0x1]
        %v433 = vld [vmem:[%s431] sm:$0x1]
        %v434 = vadd.f32 %v433, 1.0
        %v435 = vmul.f32 %v432, %v432
        %v436 = vsub.f32 %v434, %v435
        %v437 = vmul.f32 %v433, 1.442695
        %v438 = vpow.pop %v437
        %v439 = vsub.f32 %v436, %v438
        %vm440 = vcmask 253952
        %v441 = vsel %vm440, %v439, 0.0
        %442 = vadd.xlane.f32.xlu0 %v441
        %v443 = vpop.xlane.xlu0 %442
        %v444 = vrot.slane %v443, 4
        %v445 = vadd.f32 %v443, %v444
        %v446 = vrot.slane %v445, 2
        %v447 = vadd.f32 %v445, %v446
        %v448 = vrot.slane %v447, 1
        %v449 = vadd.f32 %v447, %v448
        %s450 = vtos %v449
        %v451 = vld [vmem:[%s351] sm:$0xff]
        %v452 = vld [vmem:[%s351 + $0x8] sm:$0xff]
        %v453 = vld [vmem:[%s360] sm:$0xff]
        %v454 = vld [vmem:[%s360 + $0x8] sm:$0xff]
        %v455 = vsub.f32 %v451, %v453
        %v456 = vsub.f32 %v452, %v454
        %v457 = vand.u32 2147483647, %v455
        %v458 = vand.u32 2147483647, %v456
        %v459 = vld [vmem:[%s369] sm:$0xff]
        %v460 = vld [vmem:[%s369 + $0x8] sm:$0xff]
        %v461 = vmax.f32 %v459, 1e-06
        %v462 = vmax.f32 %v460, 1e-06
        %v463 = vrcp.pop %v461
        %v464 = vrcp.pop %v462
        %v465 = vmul.f32 %v457, %v463
        %v466 = vmul.f32 %v458, %v464
        %v467 = vlog2.pop %v461
        %v468 = vmul.f32 %v467, 0.6931472
        %v469 = vlog2.pop %v462
        %v470 = vmul.f32 %v469, 0.6931472
        %v471 = vadd.f32 %v465, %v468
        %v472 = vadd.f32 %v466, %v470
        %vm473 = vcmask 130048
        %v474 = vsel %vm473, %v471, 0.0
        %v475 = vsel %vm473, %v472, 0.0
        %v476 = vadd.f32 %v474, %v475
        %477 = vadd.xlane.f32.xlu0 %v476
        %v478 = vpop.xlane.xlu0 %477
        %v479 = vrot.slane %v478, 4
        %v480 = vadd.f32 %v478, %v479
        %v481 = vrot.slane %v480, 2
        %v482 = vadd.f32 %v480, %v481
        %v483 = vrot.slane %v482, 1
        %v484 = vadd.f32 %v482, %v483
        %s485 = vtos %v484
        %v486 = vlaneseq
        %v487 = vand.u32 %v486, 127
        %vm488 = vcmp.lt.s32.totalorder %v487, 15
        %v489 = vlaneseq
        %v490 = vshrl.u32 %v489, 7
        %v491 = vadd.s32 %v490, 8
        %vm492 = vcmp.lt.s32.totalorder %v490, 15
        %vm493 = vcmp.lt.s32.totalorder %v491, 15
        %vm494 = vcmask 1047680
        %495 = vrot.lane.b32.xlu0 %v451, 16
        %v496 = vpop.permute.xlu0 %495
        %v497 = vsel %vm494, %v496, %v451
        %498 = vrot.lane.b32.xlu0 %v452, 16
        %v499 = vpop.permute.xlu0 %498
        %v500 = vsel %vm494, %v499, %v452
        %501 = vrot.lane.b32.xlu0 %v497, 16
        %v502 = vpop.permute.xlu0 %501
        %503 = vrot.lane.b32.xlu0 %v500, 16
        %v504 = vpop.permute.xlu0 %503
        %v505 = vsel %vm494, %v502, %v451
        %v506 = vsel %vm494, %v504, %v452
        %509 = vrot.lane.b32.xlu0 %v505, 127
        %v510 = vpop.permute.xlu0 %509
        %511 = vrot.lane.b32.xlu0 %v506, 127
        %v512 = vpop.permute.xlu0 %511
        %v515 = vsub.f32 %v451, %v510
        %v516 = vsub.f32 %v452, %v512
        %v517 = vrot.slane %v451, 1
        %v518 = vrot.slane %v452, 1
        %vm519 = vcmp.lt.s32.totalorder %v490, 7
        %v520 = vsel %vm519, %v517, %v518
        %v521 = vsel %vm519, %v518, %v517
        %v522 = vsub.f32 %v451, %v520
        %v523 = vsub.f32 %v452, %v521
        %v524 = vld [vmem:[%s378] sm:$0xff]
        %v525 = vld [vmem:[%s378 + $0x8] sm:$0xff]
        %526 = vrot.lane.b32.xlu0 %v524, 16
        %v527 = vpop.permute.xlu0 %526
        %v528 = vsel %vm494, %v527, %v524
        %529 = vrot.lane.b32.xlu0 %v525, 16
        %v530 = vpop.permute.xlu0 %529
        %v531 = vsel %vm494, %v530, %v525
        %532 = vrot.lane.b32.xlu0 %v528, 16
        %v533 = vpop.permute.xlu0 %532
        %534 = vrot.lane.b32.xlu0 %v531, 16
        %v535 = vpop.permute.xlu0 %534
        %v536 = vsel %vm494, %v533, %v524
        %v537 = vsel %vm494, %v535, %v525
        %540 = vrot.lane.b32.xlu0 %v536, 127
        %v541 = vpop.permute.xlu0 %540
        %542 = vrot.lane.b32.xlu0 %v537, 127
        %v543 = vpop.permute.xlu0 %542
        %v546 = vsub.f32 %v524, %v541
        %v547 = vsub.f32 %v525, %v543
        %v548 = vand.u32 2147483647, %v546
        %v549 = vand.u32 2147483647, %v547
        %v550 = vadd.f32 %v548, 0.0
        %v551 = vadd.f32 %v549, 0.0
        %v552 = vrot.slane %v524, 1
        %v553 = vrot.slane %v525, 1
        %v554 = vsel %vm519, %v552, %v553
        %v555 = vsel %vm519, %v553, %v552
        %v556 = vsub.f32 %v524, %v554
        %v557 = vsub.f32 %v525, %v555
        %v558 = vand.u32 2147483647, %v556
        %v559 = vand.u32 2147483647, %v557
        %v560 = vadd.f32 %v558, 0.0
        %v561 = vadd.f32 %v559, 0.0
        %s562 = scalar_lea.vmem %s378, 16 [#allocation10]
        %v563 = vld [vmem:[%s562] sm:$0xff]
        %v564 = vld [vmem:[%s562 + $0x8] sm:$0xff]
        %565 = vrot.lane.b32.xlu0 %v563, 16
        %v566 = vpop.permute.xlu0 %565
        %v567 = vsel %vm494, %v566, %v563
        %568 = vrot.lane.b32.xlu0 %v564, 16
        %v569 = vpop.permute.xlu0 %568
        %v570 = vsel %vm494, %v569, %v564
        %571 = vrot.lane.b32.xlu0 %v567, 16
        %v572 = vpop.permute.xlu0 %571
        %573 = vrot.lane.b32.xlu0 %v570, 16
        %v574 = vpop.permute.xlu0 %573
        %v575 = vsel %vm494, %v572, %v563
        %v576 = vsel %vm494, %v574, %v564
        %579 = vrot.lane.b32.xlu0 %v575, 127
        %v580 = vpop.permute.xlu0 %579
        %581 = vrot.lane.b32.xlu0 %v576, 127
        %v582 = vpop.permute.xlu0 %581
        %v585 = vsub.f32 %v563, %v580
        %v586 = vsub.f32 %v564, %v582
        %v587 = vand.u32 2147483647, %v585
        %v588 = vand.u32 2147483647, %v586
        %v589 = vadd.f32 %v550, %v587
        %v590 = vadd.f32 %v551, %v588
        %v591 = vrot.slane %v563, 1
        %v592 = vrot.slane %v564, 1
        %v593 = vsel %vm519, %v591, %v592
        %v594 = vsel %vm519, %v592, %v591
        %v595 = vsub.f32 %v563, %v593
        %v596 = vsub.f32 %v564, %v594
        %v597 = vand.u32 2147483647, %v595
        %v598 = vand.u32 2147483647, %v596
        %v599 = vadd.f32 %v560, %v597
        %v600 = vadd.f32 %v561, %v598
        %s601 = scalar_lea.vmem %s378, 32 [#allocation10]
        %v602 = vld [vmem:[%s601] sm:$0xff]
        %v603 = vld [vmem:[%s601 + $0x8] sm:$0xff]
        %604 = vrot.lane.b32.xlu0 %v602, 16
        %v605 = vpop.permute.xlu0 %604
        %v606 = vsel %vm494, %v605, %v602
        %607 = vrot.lane.b32.xlu0 %v603, 16
        %v608 = vpop.permute.xlu0 %607
        %v609 = vsel %vm494, %v608, %v603
        %610 = vrot.lane.b32.xlu0 %v606, 16
        %v611 = vpop.permute.xlu0 %610
        %612 = vrot.lane.b32.xlu0 %v609, 16
        %v613 = vpop.permute.xlu0 %612
        %v614 = vsel %vm494, %v611, %v602
        %v615 = vsel %vm494, %v613, %v603
        %618 = vrot.lane.b32.xlu0 %v614, 127
        %v619 = vpop.permute.xlu0 %618
        %620 = vrot.lane.b32.xlu0 %v615, 127
        %v621 = vpop.permute.xlu0 %620
        %v624 = vsub.f32 %v602, %v619
        %v625 = vsub.f32 %v603, %v621
        %v626 = vand.u32 2147483647, %v624
        %v627 = vand.u32 2147483647, %v625
        %v628 = vadd.f32 %v589, %v626
        %v629 = vadd.f32 %v590, %v627
        %v630 = vrot.slane %v602, 1
        %v631 = vrot.slane %v603, 1
        %v632 = vsel %vm519, %v630, %v631
        %v633 = vsel %vm519, %v631, %v630
        %v634 = vsub.f32 %v602, %v632
        %v635 = vsub.f32 %v603, %v633
        %v636 = vand.u32 2147483647, %v634
        %v637 = vand.u32 2147483647, %v635
        %v638 = vadd.f32 %v599, %v636
        %v639 = vadd.f32 %v600, %v637
        %v640 = vsub.f32 0.0, %v628
        %v641 = vsub.f32 0.0, %v629
        %v642 = vmul.f32 %v640, 0.33333334
        %v643 = vmul.f32 %v641, 0.33333334
        %v644 = vmul.f32 %v642, 1.442695
        %v645 = vpow.pop %v644
        %v646 = vmul.f32 %v643, 1.442695
        %v647 = vpow.pop %v646
        %v648 = vsub.f32 0.0, %v638
        %v649 = vsub.f32 0.0, %v639
        %v650 = vmul.f32 %v648, 0.33333334
        %v651 = vmul.f32 %v649, 0.33333334
        %v652 = vmul.f32 %v650, 1.442695
        %v653 = vpow.pop %v652
        %v654 = vmul.f32 %v651, 1.442695
        %v655 = vpow.pop %v654
        %v656 = vand.u32 2147483647, %v515
        %v657 = vand.u32 2147483647, %v516
        %v658 = vmul.f32 %v656, %v645
        %v659 = vmul.f32 %v657, %v647
        %v660 = vsel %vm488, %v658, 0.0
        %v661 = vsel %vm488, %v659, 0.0
        %v662 = vsel %vm473, %v660, 0.0
        %v663 = vsel %vm473, %v661, 0.0
        %v664 = vadd.f32 %v662, %v663
        %665 = vadd.xlane.f32.xlu0 %v664
        %v666 = vpop.xlane.xlu0 %665
        %v667 = vrot.slane %v666, 4
        %v668 = vadd.f32 %v666, %v667
        %v669 = vrot.slane %v668, 2
        %v670 = vadd.f32 %v668, %v669
        %v671 = vrot.slane %v670, 1
        %v672 = vadd.f32 %v670, %v671
        %s673 = vtos %v672
        %v674 = vand.u32 2147483647, %v522
        %v675 = vand.u32 2147483647, %v523
        %v676 = vmul.f32 %v674, %v653
        %v677 = vmul.f32 %v675, %v655
        %v678 = vsel %vm492, %v676, 0.0
        %v679 = vsel %vm493, %v677, 0.0
        %v680 = vsel %vm473, %v678, 0.0
        %v681 = vsel %vm473, %v679, 0.0
        %v682 = vadd.f32 %v680, %v681
        %683 = vadd.xlane.f32.xlu0 %v682
        %v684 = vpop.xlane.xlu0 %683
        %v685 = vrot.slane %v684, 4
        %v686 = vadd.f32 %v684, %v685
        %v687 = vrot.slane %v686, 2
        %v688 = vadd.f32 %v686, %v687
        %v689 = vrot.slane %v688, 1
        %v690 = vadd.f32 %v688, %v689
        %s691 = vtos %v690
        %s692 = scalar_lea.smem %s428, 0 [#allocation11]
        %693 = sst [smem:[%s692]] %s450
        %s694 = scalar_lea.smem %s428, 1 [#allocation11]
        %695 = sst [smem:[%s694]] %s485
        %s696 = scalar_lea.smem %s428, 2 [#allocation11]
        %697 = sst [smem:[%s696]] %s673
        %s698 = scalar_lea.smem %s428, 3 [#allocation11]
        %699 = sst [smem:[%s698]] %s691
        %s700 = sand.u32 %s193, 1
        %s701 = scalar_lea.sflag [#allocation4], %s700
        %s702 = sand.u32 %s193, 1
        %s703 = smul.addr %s702, 128
        %s704 = scalar_lea.smem [#allocation11], %s703
        // Predicated region
        $region65: #{tpu_custom_call.1} parent=43 // pred_check
          %p705 = pneg %p203
        $region66: #{tpu_custom_call.1} parent=43 // pred_check_branch
          %707 = sbr.rel (%p705) target = $region68
        $region67: #{tpu_custom_call.1} parent=43 // pred_region
          %s709 = ssub.s32 16, 16
          %710 = vsyncadd %s701, %s709
          %s711 = smul.addr %s29, 16
          %s712 = scalar_lea.hbm %s6, %s711
          %715 = dma.smem_to_hbm %s704, 16, %s712, %s701
        $region68: #{tpu_custom_call.1} parent=43 // pred_fallthru
          _
      $region44: #{tpu_custom_call.1} parent=5 // pred_fallthru
        _
      %p716 = scmp.le.s32.totalorder 2, %s24
      // Predicated region
      $region69: #{tpu_custom_call.1} parent=5 // pred_check
        %p717 = pneg %p716
      $region70: #{tpu_custom_call.1} parent=5 // pred_check_branch
        %719 = sbr.rel (%p717) target = $region72
      $region71: #{tpu_custom_call.1} parent=5 // pred_region
        %s720 = ssub.s32 %s24, 2
        // Predicated region
        $region73: #{tpu_custom_call.1} parent=71 // pred_check
          %p721 = pneg %p209
        $region74: #{tpu_custom_call.1} parent=71 // pred_check_branch
          %723 = sbr.rel (%p721) target = $region76
        $region75: #{tpu_custom_call.1} parent=71 // pred_region
          %s724 = sand.u32 %s194, 1
          %s725 = scalar_lea.sflag [#allocation4], %s724
          %s726 = sand.u32 %s194, 1
          %s727 = smul.addr %s726, 128
          %s728 = scalar_lea.smem [#allocation11], %s727
          %729 = dma.done %s725, 16
        $region76: #{tpu_custom_call.1} parent=71 // pred_fallthru
          _
        %730 = sfence
      $region72: #{tpu_custom_call.1} parent=5 // pred_fallthru
        _
    $region6: #{tpu_custom_call.1} parent=1 // loop_footer
      %s28 = sadd.s32 1, %s24
    $region7: #{tpu_custom_call.1} parent=1 // loop_footer_branch
      %23 = sbr.rel target = $region3
    $region8: #{tpu_custom_call.1} parent=1 // loop_exit
      _
    %731 = vsyncpa [#allocation3], 1
    %s732 = scalar_lea.sflag [#allocation3], 1
    %733 = vsyncpa %s732, 1
    %734 = vsyncpa [#allocation6], 1
    %s735 = scalar_lea.sflag [#allocation6], 1
    %736 = vsyncpa %s735, 1
    %737 = vsyncpa [#allocation9], 1
    %s738 = scalar_lea.sflag [#allocation9], 1
    %739 = vsyncpa %s738, 1
    %740 = vsyncpa [#allocation4], 1
    %s741 = scalar_lea.sflag [#allocation4], 1
    %742 = vsyncpa %s741, 1

</llo_original>
